<compile_context>
chip_gen: v5e
topology: v5e:2x2
jax: 0.10.0
libtpu: 0.0.40
codegen_flags: <defaults>
</compile_context>

<pallas_src>
import jax
import jax.numpy as jnp
from jax import lax
from jax.experimental import pallas as pl
from jax.experimental.pallas import tpu as pltpu


def _cdiv(a: int, b: int) -> int:
    return (a + b - 1) // b


def _round_up(v: int, m: int) -> int:
    return _cdiv(v, m) * m


_TARGET_BLOCK_BYTES = 1 << 20  # aim for ~1 MiB streamed x-block per grid step


def _batch_tiling(B: int, D: int, itemsize: int):
    """Pick (TB, n_steps, Bp) for the batch-tiled pipeline."""
    # Tile cap chosen so a streamed (TB, D) block is ~1 MiB (>=85% of the
    # measured HBM roofline for tiled streams); never below 1024 rows.
    tb_cap = max(1024, _round_up(_TARGET_BLOCK_BYTES // max(1, D * itemsize), 8))
    n_steps = max(1, _cdiv(B, tb_cap))
    # For large batches prefer an even number of grid steps so the "parallel"
    # axis splits evenly across v7x's two TensorCores.
    if B >= 2048 and n_steps % 2 == 1:
        n_steps += 1
    TB = _round_up(_cdiv(B, n_steps), 8)      # f32 sublane multiple
    Bp = n_steps * TB                          # wasted tail < 8 rows per step
    return TB, n_steps, Bp


def _autograd_wrapper_kernel(x_ref, w1_ref, b1_ref, w1s_ref, grad_ref):
    # x_ref:    (TB, D)   batch tile (streamed)
    # w1_ref:   (D,  H)   resident first-layer weight
    # b1_ref:   (1,  H)   resident first-layer bias (row)
    # w1s_ref:  (D,  H)   resident W1 * w2 (output weight folded in)
    # grad_ref: (TB, D)   output gradient tile (streamed)
    x = x_ref[...]

    # Forward hidden activation: MXU matmul + VPU add + EUP tanh, f32.
    pre = jnp.dot(x, w1_ref[...], preferred_element_type=jnp.float32) + b1_ref[...]
    h = jnp.tanh(pre)                                                # (TB, H)

    # Backward: d(sum E)/dx = (1 - h^2) @ (W1 * w2)^T
    # Contract H of both operands directly -> no materialized transpose.
    g = 1.0 - h * h                                                  # (TB, H)
    grad = lax.dot_general(
        g, w1s_ref[...],
        dimension_numbers=(((1,), (1,)), ((), ())),
        preferred_element_type=jnp.float32,
    )                                                                # (TB, D)
    grad_ref[...] = grad.astype(grad_ref.dtype)


def prepare_autograd_wrapper_params(w1, b1, w2):
    """One-time weight prep (call once per model, reuse across forward calls)."""
    f32 = jnp.float32
    w1f = w1.astype(f32)                          # (D, H)
    b1_row = b1.astype(f32).reshape(1, -1)        # (1, H)
    w1s = w1f * w2.astype(f32)[None, :]           # (D, H) -- w2 folded in once
    return w1f, b1_row, w1s


def autograd_grad(x, prepared):
    """grad of sum(backbone(x)) w.r.t. x using pre-prepared weights."""
    w1f, b1_row, w1s = prepared
    B, D = x.shape
    H = w1f.shape[1]

    TB, n_steps, Bp = _batch_tiling(B, D, jnp.dtype(x.dtype).itemsize)

    # Pad only the batch dim (at most 7 rows per grid step); no lane padding.
    x_p = x if Bp == B else jnp.pad(x, ((0, Bp - B), (0, 0)))

    # Explicit VMEM budget: double-buffered x + grad blocks, resident weights.
    blk_bytes = TB * D * jnp.dtype(x.dtype).itemsize
    vmem_est = 2 * 2 * blk_bytes + 2 * 2 * D * H * 4 + 2 * H * 4
    cp_kwargs = dict(dimension_semantics=("parallel",))
    if vmem_est > 16 * 1024 * 1024:     # smallest (v5e) scoped default
        cp_kwargs["vmem_limit_bytes"] = min(int(vmem_est * 3 // 2), 60 * 1024 * 1024)
    compiler_params = pltpu.CompilerParams(**cp_kwargs)

    grad_p = pl.pallas_call(
        _autograd_wrapper_kernel,
        out_shape=jax.ShapeDtypeStruct((Bp, D), x.dtype),
        grid_spec=pl.GridSpec(
            grid=(n_steps,),
            in_specs=[
                pl.BlockSpec((TB, D), lambda i: (i, 0)),   # x tile (streamed)
                pl.BlockSpec((D, H), lambda i: (0, 0)),    # W1 (resident)
                pl.BlockSpec((1, H), lambda i: (0, 0)),    # b1 (resident)
                pl.BlockSpec((D, H), lambda i: (0, 0)),    # W1*w2 (resident)
            ],
            out_specs=pl.BlockSpec((TB, D), lambda i: (i, 0)),
        ),
        compiler_params=compiler_params,
    )(x_p, w1f, b1_row, w1s)

    return grad_p if Bp == B else grad_p[:B]


def autograd_output_wrapper(x, w1, b1, w2, b2):
    """Full-equivalence convenience wrapper (prepares weights per call)."""
    del b2  # output-layer bias does not affect the gradient
    # TODO(synk): the PyTorch module is generic over any backbone / output_mask;
    # this kernel specializes to the tanh-MLP energy backbone with output_mask=0.
    return autograd_grad(x, prepare_autograd_wrapper_params(w1, b1, w2))


def _backbone_ref(x, w1, b1, w2, b2):
    """Pure-JAX backbone (energy MLP), used only for the autodiff reference check."""
    return jnp.tanh(x @ w1 + b1[None, :]) @ w2.reshape(-1, 1) + b2


if __name__ == "__main__":
    B, D, H = 8, 32, 64

    key = jax.random.PRNGKey(0)
    kx, k1, kb1, k2, kb2 = jax.random.split(key, 5)
    x = jax.random.normal(kx, (B, D), dtype=jnp.float32)
    w1 = jax.random.normal(k1, (D, H), dtype=jnp.float32) * 0.1
    b1 = jax.random.normal(kb1, (H,), dtype=jnp.float32) * 0.1
    w2 = jax.random.normal(k2, (H,), dtype=jnp.float32) * 0.1
    b2 = jax.random.normal(kb2, (1,), dtype=jnp.float32) * 0.1

    # Weights prepared once (hoisted out of the per-step path), then forward.
    prepared = prepare_autograd_wrapper_params(w1, b1, w2)
    grad = autograd_grad(x, prepared)
    grad = jax.block_until_ready(grad)

    # Reference: exact semantics of torch.autograd.grad(out, x, ones_like(out))[0]
    ref = jax.grad(lambda xx: jnp.sum(_backbone_ref(xx, w1, b1, w2, b2)))(x)
    assert grad.shape == (B, D)
    assert jnp.allclose(grad, ref, atol=1e-5, rtol=1e-5), "mismatch vs autodiff reference"

    print("KERNEL_OK")
</pallas_src>

<mosaic_0001>
module attributes {stable_mosaic.version = 11 : i64} {
  func.func @_autograd_wrapper_kernel(%arg0: i32, %arg1: memref<8x32xf32, #tpu.memory_space<vmem>>, %arg2: memref<32x64xf32, #tpu.memory_space<vmem>>, %arg3: memref<1x64xf32, #tpu.memory_space<vmem>>, %arg4: memref<32x64xf32, #tpu.memory_space<vmem>>, %arg5: memref<8x32xf32, #tpu.memory_space<vmem>>) attributes {dimension_semantics = [#tpu.dimension_semantics<parallel>], iteration_bounds = array<i64: 1>, scalar_prefetch = 0 : i64, scratch_operands = 0 : i64, tpu.core_type = #tpu.core_type<tc>, window_params = [{transform_indices = @transform_0, window_bounds = array<i64: 8, 32>}, {pipeline_mode = #tpu.pipeline_mode<synchronous>, transform_indices = @transform_1, window_bounds = array<i64: 32, 64>}, {pipeline_mode = #tpu.pipeline_mode<synchronous>, transform_indices = @transform_2, window_bounds = array<i64: 1, 64>}, {pipeline_mode = #tpu.pipeline_mode<synchronous>, transform_indices = @transform_3, window_bounds = array<i64: 32, 64>}, {transform_indices = @transform_4, window_bounds = array<i64: 8, 32>}]} {
    %c0 = arith.constant 0 : index
    %c0_0 = arith.constant 0 : index
    %0 = vector.load %arg1[%c0, %c0_0] : memref<8x32xf32, #tpu.memory_space<vmem>>, vector<8x32xf32>
    %c0_1 = arith.constant 0 : index
    %c0_2 = arith.constant 0 : index
    %1 = vector.load %arg2[%c0_1, %c0_2] : memref<32x64xf32, #tpu.memory_space<vmem>>, vector<32x64xf32>
    %cst = arith.constant dense<0.000000e+00> : vector<8x64xf32>
    %2 = tpu.matmul %0, %1, %cst {dimension_numbers = #tpu.dot_dimension_numbers<[1], [0], [0], [1], [0, 0, 1, 1], [], []>} : vector<8x32xf32>, vector<32x64xf32>, vector<8x64xf32> -> vector<8x64xf32>
    %c0_3 = arith.constant 0 : index
    %c0_4 = arith.constant 0 : index
    %3 = vector.load %arg3[%c0_3, %c0_4] : memref<1x64xf32, #tpu.memory_space<vmem>>, vector<1x64xf32>
    %4 = vector.broadcast %3 : vector<1x64xf32> to vector<8x64xf32>
    %5 = arith.addf %2, %4 : vector<8x64xf32>
    %6 = math.tanh %5 : vector<8x64xf32>
    %7 = arith.mulf %6, %6 : vector<8x64xf32>
    %cst_5 = arith.constant 1.000000e+00 : f32
    %8 = vector.broadcast %cst_5 : f32 to vector<8x64xf32>
    %9 = arith.subf %8, %7 : vector<8x64xf32>
    %c0_6 = arith.constant 0 : index
    %c0_7 = arith.constant 0 : index
    %10 = vector.load %arg4[%c0_6, %c0_7] : memref<32x64xf32, #tpu.memory_space<vmem>>, vector<32x64xf32>
    %cst_8 = arith.constant dense<0.000000e+00> : vector<8x32xf32>
    %11 = tpu.matmul %9, %10, %cst_8 {dimension_numbers = #tpu.dot_dimension_numbers<[1], [1], [0], [0], [0, 0, 1, 0], [], []>} : vector<8x64xf32>, vector<32x64xf32>, vector<8x32xf32> -> vector<8x32xf32>
    %c0_9 = arith.constant 0 : index
    %c0_10 = arith.constant 0 : index
    %12 = vector.load %arg5[%c0_9, %c0_10] : memref<8x32xf32, #tpu.memory_space<vmem>>, vector<8x32xf32>
    tpu.vector_store %arg5[%c0_9, %c0_10], %11 {strides = array<i32>} : memref<8x32xf32, #tpu.memory_space<vmem>>, vector<8x32xf32>,
    return
  }
  func.func @transform_0(%arg0: i32) -> (i32, i32) {
    %c0_i32 = arith.constant 0 : i32
    %c0_i32_0 = arith.constant 0 : i32
    return %arg0, %c0_i32 : i32, i32
  }
  func.func @transform_1(%arg0: i32) -> (i32, i32) {
    %c0_i32 = arith.constant 0 : i32
    %c0_i32_0 = arith.constant 0 : i32
    %c0_i32_1 = arith.constant 0 : i32
    return %c0_i32, %c0_i32_0 : i32, i32
  }
  func.func @transform_2(%arg0: i32) -> (i32, i32) {
    %c0_i32 = arith.constant 0 : i32
    %c0_i32_0 = arith.constant 0 : i32
    %c0_i32_1 = arith.constant 0 : i32
    return %c0_i32, %c0_i32_0 : i32, i32
  }
  func.func @transform_3(%arg0: i32) -> (i32, i32) {
    %c0_i32 = arith.constant 0 : i32
    %c0_i32_0 = arith.constant 0 : i32
    %c0_i32_1 = arith.constant 0 : i32
    return %c0_i32, %c0_i32_0 : i32, i32
  }
  func.func @transform_4(%arg0: i32) -> (i32, i32) {
    %c0_i32 = arith.constant 0 : i32
    %c0_i32_0 = arith.constant 0 : i32
    return %arg0, %c0_i32 : i32, i32
  }
}

</mosaic_0001>

<llo_original>
// kernel: tpu_custom_call.1
$region0: #{tpu_custom_call.1}
  #allocation0 [shape = 'u32[]', space=smem, size = 0x4, offset = 0x4, fixed_abs, tag = 'smem constant byte address 0x4 - core index']
  #allocation1 [shape = 'u32[72,128]{1,0:T(1,128)}', space=vmem, size = 0x9000, scoped, tag = 'internal scratch']
  %s0 = inlined_call_operand.hbm [shape: f32[8,32], index: 0, kind: input, shape index: {}]
  %s1 = inlined_call_operand.hbm [shape: f32[32,64], index: 1, kind: input, shape index: {}]
  %s2 = inlined_call_operand.vmem [shape: f32[1,64], index: 2, kind: input, shape index: {}]
  %s3 = inlined_call_operand.hbm [shape: f32[32,64], index: 3, kind: input, shape index: {}]
  %s4 = inlined_call_operand.hbm [shape: f32[8,32], index: 4, kind: output, shape index: {}]
  %s5 = sld [smem:[#allocation0]]
  $region38: #{tpu_custom_call.1} parent=0
    _
  %s7 = ssub.s32 1, %s5
  %s8 = scalar_select 0, %s7, %s5
  $region1: #{tpu_custom_call.1} parent=0
    #allocation2 [shape = 'u8[4096]{0}', space=vmem, size = 0x1000, scoped, tag = 'input window, operand 0, single buffered']
    #allocation3 [shape = 's32[1]{0}', space=sflag, size = 0x4, scoped, tag = 'scoped memory for tpu_custom_call.1']
    #allocation4 [shape = 's32[1]{0}', space=sflag, size = 0x4, scoped, tag = 'scoped memory for tpu_custom_call.1']
    #allocation5 [shape = 'u8[16384]{0}', space=vmem, size = 0x4000, scoped, tag = 'input window, operand 1, single buffered']
    #allocation6 [shape = 's32[1]{0}', space=sflag, size = 0x4, scoped, tag = 'scoped memory for tpu_custom_call.1']
    #allocation7 [shape = 'u8[16384]{0}', space=vmem, size = 0x4000, scoped, tag = 'input window, operand 3, single buffered']
    #allocation8 [shape = 'u8[4096]{0}', space=vmem, size = 0x1000, scoped, tag = 'output window, operand 0, single buffered']
    %9 = vsyncpa [#allocation3], 0
    %10 = vsyncpa [#allocation6], 0
    %11 = vsyncpa [#allocation4], 0
    // Predicated region
    $region2: #{tpu_custom_call.1} parent=1 // pred_check
      _
    $region3: #{tpu_custom_call.1} parent=1 // pred_check_branch
      %13 = sbr.rel (0) target = $region5
    $region4: #{tpu_custom_call.1} parent=1 // pred_region
      %15 = vsyncadd [#allocation3], 0
      %s17 = sshll.u32 %s0, 4
      %s18 = int_to_ptr.hbm [resolvable:$true] %s17
      %s19 = sshll.u32 [#allocation2], 4
      %s20 = int_to_ptr.vmem [resolvable:$true] %s19
      %22 = dma.hbm_to_vmem [thread:$0]  %s18, 128, %s20, [#allocation3]
    $region5: #{tpu_custom_call.1} parent=1 // pred_fallthru
      _
    // Predicated region
    $region6: #{tpu_custom_call.1} parent=1 // pred_check
      _
    $region7: #{tpu_custom_call.1} parent=1 // pred_check_branch
      %24 = sbr.rel (0) target = $region9
    $region8: #{tpu_custom_call.1} parent=1 // pred_region
      %26 = vsyncadd [#allocation6], 0
      %s27 = sshll.u32 %s1, 4
      %s28 = int_to_ptr.hbm [resolvable:$true] %s27
      %s29 = sshll.u32 [#allocation5], 4
      %s30 = int_to_ptr.vmem [resolvable:$true] %s29
      %35 = dma.hbm_to_vmem [thread:$0]  %s28, 512, %s30, [#allocation6], 128, 128, 8
    $region9: #{tpu_custom_call.1} parent=1 // pred_fallthru
      _
    // Predicated region
    $region10: #{tpu_custom_call.1} parent=1 // pred_check
      _
    $region11: #{tpu_custom_call.1} parent=1 // pred_check_branch
      %37 = sbr.rel (0) target = $region13
    $region12: #{tpu_custom_call.1} parent=1 // pred_region
      _
    $region13: #{tpu_custom_call.1} parent=1 // pred_fallthru
      _
    // Predicated region
    $region14: #{tpu_custom_call.1} parent=1 // pred_check
      _
    $region15: #{tpu_custom_call.1} parent=1 // pred_check_branch
      %39 = sbr.rel (0) target = $region17
    $region16: #{tpu_custom_call.1} parent=1 // pred_region
      %41 = vsyncadd [#allocation6], 0
      %s42 = sshll.u32 %s3, 4
      %s43 = int_to_ptr.hbm [resolvable:$true] %s42
      %s44 = sshll.u32 [#allocation7], 4
      %s45 = int_to_ptr.vmem [resolvable:$true] %s44
      %50 = dma.hbm_to_vmem [thread:$0]  %s43, 512, %s45, [#allocation6], 128, 128, 8
    $region17: #{tpu_custom_call.1} parent=1 // pred_fallthru
      _
    // Predicated region
    $region18: #{tpu_custom_call.1} parent=1 // pred_check
      _
    $region19: #{tpu_custom_call.1} parent=1 // pred_check_branch
      %52 = sbr.rel (0) target = $region21
    $region20: #{tpu_custom_call.1} parent=1 // pred_region
      %54 = dma.done [#allocation3], 128
    $region21: #{tpu_custom_call.1} parent=1 // pred_fallthru
      _
    // Predicated region
    $region22: #{tpu_custom_call.1} parent=1 // pred_check
      _
    $region23: #{tpu_custom_call.1} parent=1 // pred_check_branch
      %56 = sbr.rel (0) target = $region25
    $region24: #{tpu_custom_call.1} parent=1 // pred_region
      %58 = dma.done [#allocation6], 512
    $region25: #{tpu_custom_call.1} parent=1 // pred_fallthru
      _
    // Predicated region
    $region26: #{tpu_custom_call.1} parent=1 // pred_check
      _
    $region27: #{tpu_custom_call.1} parent=1 // pred_check_branch
      %60 = sbr.rel (0) target = $region29
    $region28: #{tpu_custom_call.1} parent=1 // pred_region
      %62 = dma.done [#allocation6], 512
    $region29: #{tpu_custom_call.1} parent=1 // pred_fallthru
      _
    %v63 = vld [vmem:[#allocation2] sm:$0xff]
    %v64 = vld [vmem:[#allocation5] sm:$0xff]
    %v65 = vld [vmem:[#allocation5 + $0x8] sm:$0xff]
    %v66 = vld [vmem:[#allocation5 + $0x10] sm:$0xff]
    %v67 = vld [vmem:[#allocation5 + $0x18] sm:$0xff]
    %v68 = vld [vmem:[%s2] sm:$0x1]
    %v70 = vperm.slane %v68, 0
    %vm72 = vcmask 261120
    %v74 = vsel %vm72, %v63, 0
    %76 = vmatpush.msra.mxu0 0.0
    %77 = vmatpush.msra.mxu0 0.0
    %78 = vmatpush.msra.mxu0 0.0
    %79 = vmatpush.msra.mxu0 0.0
    %80 = vmatpush.msra.mxu0 0.0
    %81 = vmatpush.msra.mxu0 0.0
    %82 = vmatpush.msra.mxu0 0.0
    %83 = vmatpush.msra.mxu0 0.0
    %84 = vmatpush.msra.mxu0 0.0
    %85 = vmatpush.msra.mxu0 0.0
    %86 = vmatpush.msra.mxu0 0.0
    %87 = vmatpush.msra.mxu0 0.0
    %88 = vmatpush.msra.mxu0 %v67
    %89 = vmatpush.msra.mxu0 %v66
    %90 = vmatpush.msra.mxu0 %v65
    %91 = vmatpush.msra.mxu0 %v64
    %92 = vmatmul.f32.gmra.mxu0 %v74
    %v93 = vpop.f32.mrf.mxu0
    %v94 = vadd.f32 %v70, %v93
    %95 = vdwg.mxu0
    %v96 = vtanh.pop %v94
    %v97 = vmul.f32 %v96, %v96
    %v98 = vsub.f32 1.0, %v97
    %v99 = vld [vmem:[#allocation7] sm:$0xff]
    %v100 = vld [vmem:[#allocation7 + $0x8] sm:$0xff]
    %v101 = vld [vmem:[#allocation7 + $0x10] sm:$0xff]
    %v102 = vld [vmem:[#allocation7 + $0x18] sm:$0xff]
    %vm103 = vcmask 523264
    %v105 = vsel %vm103, %v98, 0
    %v108 = vsel %vm103, %v99, 0
    %v111 = vsel %vm103, %v100, 0
    %v114 = vsel %vm103, %v101, 0
    %v117 = vsel %vm103, %v102, 0
    %119 = vmatpush.xpose.msra.mxu0 0.0
    %120 = vmatpush.xpose.msra.mxu0 0.0
    %121 = vmatpush.xpose.msra.mxu0 0.0
    %122 = vmatpush.xpose.msra.mxu0 0.0
    %123 = vmatpush.xpose.msra.mxu0 0.0
    %124 = vmatpush.xpose.msra.mxu0 0.0
    %125 = vmatpush.xpose.msra.mxu0 0.0
    %126 = vmatpush.xpose.msra.mxu0 0.0
    %127 = vmatpush.xpose.msra.mxu0 0.0
    %128 = vmatpush.xpose.msra.mxu0 0.0
    %129 = vmatpush.xpose.msra.mxu0 0.0
    %130 = vmatpush.xpose.msra.mxu0 0.0
    %131 = vmatpush.xpose.msra.mxu0 %v117
    %132 = vmatpush.xpose.msra.mxu0 %v114
    %133 = vmatpush.xpose.msra.mxu0 %v111
    %134 = vmatpush.xpose.msra.mxu0 %v108
    %135 = vmatmul.f32.gmra.mxu0 %v105
    %v136 = vpop.f32.mrf.mxu0
    %v137 = vadd.f32 0.0, %v136
    %138 = vdwg.mxu0
    %139 = vst.msk [vmem:[#allocation8] sm:$0xff] %vm72, %v137
    // Predicated region
    $region30: #{tpu_custom_call.1} parent=1 // pred_check
      _
    $region31: #{tpu_custom_call.1} parent=1 // pred_check_branch
      %141 = sbr.rel (0) target = $region33
    $region32: #{tpu_custom_call.1} parent=1 // pred_region
      %143 = vsyncadd [#allocation4], 0
      %s145 = sshll.u32 [#allocation8], 4
      %s146 = int_to_ptr.vmem [resolvable:$true] %s145
      %s147 = sshll.u32 %s4, 4
      %s148 = int_to_ptr.hbm [resolvable:$true] %s147
      %150 = dma.vmem_to_hbm [thread:$0]  %s146, 128, %s148, [#allocation4]
    $region33: #{tpu_custom_call.1} parent=1 // pred_fallthru
      _
    // Predicated region
    $region34: #{tpu_custom_call.1} parent=1 // pred_check
      _
    $region35: #{tpu_custom_call.1} parent=1 // pred_check_branch
      %152 = sbr.rel (0) target = $region37
    $region36: #{tpu_custom_call.1} parent=1 // pred_region
      %154 = dma.done [#allocation4], 128
    $region37: #{tpu_custom_call.1} parent=1 // pred_fallthru
      _
    %155 = vsyncpa [#allocation3], 1
    %156 = vsyncpa [#allocation6], 1
    %157 = vsyncpa [#allocation4], 1

</llo_original>
